<compile_context>
chip_gen: v6e
topology: v6e:2x2x1
jax: 0.10.0
libtpu: 0.0.40
codegen_flags: <defaults>
</compile_context>

<pallas_src>
import functools

import jax
import jax.numpy as jnp
import numpy as np
from jax.experimental import pallas as pl
from jax.experimental.pallas import tpu as pltpu


# ----------------------------------------------------------------------------
# Kernels
# ----------------------------------------------------------------------------
def _bf_ln_packed_kernel(x_ref, w_ref, seg_ref, o_ref, *, inv_c, eps):
    """Lane-packed path: each 128-lane row holds PACK groups of C features.

    x_ref/o_ref: (block_rows, 128)   input dtype
    w_ref:       (1, 128) f32        weight tiled PACK times
    seg_ref:     (128, 128) bf16     block-diagonal group-membership 0/1 matrix
    """
    x = x_ref[...].astype(jnp.float32)
    seg = seg_ref[...]          # exact 0/1 in bf16
    w = w_ref[...]

    def seg_sum(v):
        # Per-group lane sum, broadcast back across the group, on the MXU
        # (XLU/VPU stay free).  bf16 hi/lo split keeps f32-level accuracy.
        hi = v.astype(jnp.bfloat16)
        lo = (v - hi.astype(jnp.float32)).astype(jnp.bfloat16)
        return (jnp.dot(hi, seg, preferred_element_type=jnp.float32) +
                jnp.dot(lo, seg, preferred_element_type=jnp.float32))

    s1 = seg_sum(x)                       # per-group sum(x)
    s2 = seg_sum(x * x)                   # per-group sum(x^2)
    mu = s1 * inv_c
    var = s2 * inv_c - mu * mu            # one-pass biased variance (f32)
    rstd = jax.lax.rsqrt(var + eps)       # EUP
    scale = rstd * w
    if o_ref.dtype == jnp.bfloat16:
        # bf16 final scaling (v6e/v7x bf16 VALUs); reductions above stay f32.
        o_ref[...] = x_ref[...] * scale.astype(jnp.bfloat16)
    else:
        o_ref[...] = (x * scale).astype(o_ref.dtype)


def _bf_ln_rows_kernel(x_ref, w_ref, o_ref, *, inv_c, eps):
    """General path: full normalized dim C on lanes (C multiple of 128, or any
    C as a full-extent block)."""
    x = x_ref[...].astype(jnp.float32)
    w = w_ref[...]
    s1 = jnp.sum(x, axis=-1, keepdims=True)
    s2 = jnp.sum(x * x, axis=-1, keepdims=True)
    mu = s1 * inv_c
    var = s2 * inv_c - mu * mu            # one-pass biased variance (f32)
    rstd = jax.lax.rsqrt(var + eps)
    scale = rstd * w                      # (bm,1)*(1,C) -> (bm,C)
    if o_ref.dtype == jnp.bfloat16:
        o_ref[...] = x_ref[...] * scale.astype(jnp.bfloat16)
    else:
        o_ref[...] = (x * scale).astype(o_ref.dtype)


# ----------------------------------------------------------------------------
# Generation-aware sizing
# ----------------------------------------------------------------------------
def _vmem_budget():
    """Return (vmem_limit_bytes, target_input_block_bytes) per generation."""
    cap = None
    try:
        cap = int(getattr(pltpu.get_tpu_info(), "vmem_capacity_bytes", 0)) or None
    except Exception:
        cap = None
    mib = 1024 * 1024
    if cap is not None and cap <= 96 * mib:
        # v7x-class: 64 MiB physical per TC -> stay <= ~48 MiB scoped; bigger
        # input blocks to amortize the ~0.35us/step overhead at 3.2 TB/s.
        return 48 * mib, 8 * mib
    if cap is None:
        # Unknown generation: conservative limit that is safe everywhere.
        return 48 * mib, 4 * mib
    # v5e / v6e: 128 MiB physical; 64 MiB scoped is safe, 4 MiB blocks reach
    # the measured 85%+ of HBM roofline.
    return 64 * mib, 4 * mib


def _choose_block_rows(num_rows, cols, itemsize, vmem_limit_bytes,
                       target_in_bytes):
    """Row-block size budgeted against the full per-step VMEM footprint:
    double-buffered input + double-buffered output (input dtype) plus ~3
    block-sized f32 temporaries.  Multiple of 8 sublanes; capped so the grid
    has >= 2 steps whenever possible (megacore row sharding on v7x)."""
    per_row_footprint = cols * (4 * itemsize + 3 * 4)
    budget_rows = max(8, int(vmem_limit_bytes * 0.75) // per_row_footprint)
    target_rows = max(8, target_in_bytes // max(1, cols * itemsize))
    rows = max(8, (min(budget_rows, target_rows) // 8) * 8)
    if num_rows >= 16:
        half = ((pl.cdiv(num_rows, 2) + 7) // 8) * 8
        rows = min(rows, half)
    if rows >= num_rows:
        return int(num_rows)
    return int(rows)


# ----------------------------------------------------------------------------
# Wrapper
# ----------------------------------------------------------------------------
def biasfree_layernorm(x, weight, *, eps=1e-5):
    """Pallas TPU implementation of BiasFree_LayerNorm.forward."""
    orig_shape = x.shape
    C = int(orig_shape[-1])
    assert weight.shape == (C,), (weight.shape, C)
    R = int(np.prod(orig_shape[:-1])) if len(orig_shape) > 1 else 1
    x2 = x.reshape(R, C)

    vmem_limit, target_in_bytes = _vmem_budget()
    itemsize = jnp.dtype(x.dtype).itemsize
    w_f32 = weight.astype(jnp.float32)

    pack = 128 // C if (C < 128 and 128 % C == 0) else 1

    if pack > 1 and R % pack == 0:
        # -------- lane-dense packed path (e.g. the shipped C = 32 case) -----
        Rp = R // pack
        Cp = pack * C                     # = 128
        xp = x2.reshape(Rp, Cp)           # free row-major reshape
        wp = jnp.tile(w_f32.reshape(1, C), (1, pack))          # (1, 128)
        idx = np.arange(Cp)
        seg = jnp.asarray((idx[:, None] // C) == (idx[None, :] // C),
                          dtype=jnp.bfloat16)                  # (128, 128)

        block_rows = _choose_block_rows(Rp, Cp, itemsize, vmem_limit,
                                        target_in_bytes)
        grid = (pl.cdiv(Rp, block_rows),)

        out = pl.pallas_call(
            functools.partial(_bf_ln_packed_kernel,
                              inv_c=1.0 / C, eps=float(eps)),
            out_shape=jax.ShapeDtypeStruct((Rp, Cp), x.dtype),
            grid_spec=pltpu.PrefetchScalarGridSpec(
                num_scalar_prefetch=0,
                grid=grid,
                in_specs=[
                    pl.BlockSpec((block_rows, Cp), lambda i: (i, 0)),
                    pl.BlockSpec((1, Cp), lambda i: (0, 0)),     # weight (const)
                    pl.BlockSpec((Cp, Cp), lambda i: (0, 0)),    # seg (const)
                ],
                out_specs=pl.BlockSpec((block_rows, Cp), lambda i: (i, 0)),
            ),
            compiler_params=pltpu.CompilerParams(
                dimension_semantics=("parallel",),
                vmem_limit_bytes=vmem_limit),
        )(xp, wp, seg)
        return out.reshape(orig_shape)

    # -------- general path: full C on lanes ---------------------------------
    w2 = w_f32.reshape(1, C)
    # Footprint uses max(C, 128): VMEM lane dim pads to 128 for small C.
    block_rows = _choose_block_rows(R, max(C, 128), itemsize, vmem_limit,
                                    target_in_bytes)
    grid = (pl.cdiv(R, block_rows),)

    out = pl.pallas_call(
        functools.partial(_bf_ln_rows_kernel, inv_c=1.0 / C, eps=float(eps)),
        out_shape=jax.ShapeDtypeStruct((R, C), x.dtype),
        grid_spec=pltpu.PrefetchScalarGridSpec(
            num_scalar_prefetch=0,
            grid=grid,
            in_specs=[
                pl.BlockSpec((block_rows, C), lambda i: (i, 0)),
                pl.BlockSpec((1, C), lambda i: (0, 0)),          # weight (const)
            ],
            out_specs=pl.BlockSpec((block_rows, C), lambda i: (i, 0)),
        ),
        compiler_params=pltpu.CompilerParams(
            dimension_semantics=("parallel",),
            vmem_limit_bytes=vmem_limit),
    )(x2, w2)
    return out.reshape(orig_shape)


# ----------------------------------------------------------------------------
# Pure-JAX reference (PyTorch BiasFree_LayerNorm semantics)
# ----------------------------------------------------------------------------
def _biasfree_layernorm_ref(x, weight, eps=1e-5):
    var = jnp.var(x.astype(jnp.float32), axis=-1, keepdims=True)  # ddof = 0
    return (x / jnp.sqrt(var + eps) * weight).astype(x.dtype)


if __name__ == "__main__":
    # Shapes consistent with the module: (batch, seq, hidden) tokens
    # normalized over hidden = 32; weight has shape (hidden,).
    B, S, C = 2, 64, 32
    key = jax.random.PRNGKey(0)
    kx, kw = jax.random.split(key)
    x = jax.random.normal(kx, (B, S, C), dtype=jnp.float32)
    weight = 1.0 + 0.1 * jax.random.normal(kw, (C,), dtype=jnp.float32)

    out = jax.block_until_ready(biasfree_layernorm(x, weight))

    ref = _biasfree_layernorm_ref(x, weight)
    np.testing.assert_allclose(np.asarray(out), np.asarray(ref),
                               rtol=1e-4, atol=1e-5)
    assert out.shape == x.shape
    print("KERNEL_OK")
</pallas_src>

<mosaic_0001>
module attributes {stable_mosaic.version = 11 : i64} {
  func.func @_bf_ln_packed_kernel(%arg0: i32, %arg1: memref<16x128xf32, #tpu.memory_space<vmem>>, %arg2: memref<1x128xf32, #tpu.memory_space<vmem>>, %arg3: memref<128x128xbf16, #tpu.memory_space<vmem>>, %arg4: memref<16x128xf32, #tpu.memory_space<vmem>>) attributes {dimension_semantics = [#tpu.dimension_semantics<parallel>], iteration_bounds = array<i64: 2>, scalar_prefetch = 0 : i64, scratch_operands = 0 : i64, tpu.core_type = #tpu.core_type<tc>, window_params = [{transform_indices = @transform_0, window_bounds = array<i64: 16, 128>}, {pipeline_mode = #tpu.pipeline_mode<synchronous>, transform_indices = @transform_1, window_bounds = array<i64: 1, 128>}, {pipeline_mode = #tpu.pipeline_mode<synchronous>, transform_indices = @transform_2, window_bounds = array<i64: 128, 128>}, {transform_indices = @transform_3, window_bounds = array<i64: 16, 128>}]} {
    %c0 = arith.constant 0 : index
    %c0_0 = arith.constant 0 : index
    %0 = vector.load %arg1[%c0, %c0_0] : memref<16x128xf32, #tpu.memory_space<vmem>>, vector<16x128xf32>
    %c0_1 = arith.constant 0 : index
    %c0_2 = arith.constant 0 : index
    %1 = vector.load %arg3[%c0_1, %c0_2] : memref<128x128xbf16, #tpu.memory_space<vmem>>, vector<128x128xbf16>
    %c0_3 = arith.constant 0 : index
    %c0_4 = arith.constant 0 : index
    %2 = vector.load %arg2[%c0_3, %c0_4] : memref<1x128xf32, #tpu.memory_space<vmem>>, vector<1x128xf32>
    %3 = arith.truncf %0 : vector<16x128xf32> to vector<16x128xbf16>
    %4 = arith.extf %3 : vector<16x128xbf16> to vector<16x128xf32>
    %5 = arith.subf %0, %4 : vector<16x128xf32>
    %6 = arith.truncf %5 : vector<16x128xf32> to vector<16x128xbf16>
    %cst = arith.constant dense<0.000000e+00> : vector<16x128xf32>
    %7 = tpu.matmul %3, %1, %cst {dimension_numbers = #tpu.dot_dimension_numbers<[1], [0], [0], [1], [0, 0, 1, 1], [], []>} : vector<16x128xbf16>, vector<128x128xbf16>, vector<16x128xf32> -> vector<16x128xf32>
    %cst_5 = arith.constant dense<0.000000e+00> : vector<16x128xf32>
    %8 = tpu.matmul %6, %1, %cst_5 {dimension_numbers = #tpu.dot_dimension_numbers<[1], [0], [0], [1], [0, 0, 1, 1], [], []>} : vector<16x128xbf16>, vector<128x128xbf16>, vector<16x128xf32> -> vector<16x128xf32>
    %9 = arith.addf %7, %8 : vector<16x128xf32>
    %10 = arith.mulf %0, %0 : vector<16x128xf32>
    %11 = arith.truncf %10 : vector<16x128xf32> to vector<16x128xbf16>
    %12 = arith.extf %11 : vector<16x128xbf16> to vector<16x128xf32>
    %13 = arith.subf %10, %12 : vector<16x128xf32>
    %14 = arith.truncf %13 : vector<16x128xf32> to vector<16x128xbf16>
    %cst_6 = arith.constant dense<0.000000e+00> : vector<16x128xf32>
    %15 = tpu.matmul %11, %1, %cst_6 {dimension_numbers = #tpu.dot_dimension_numbers<[1], [0], [0], [1], [0, 0, 1, 1], [], []>} : vector<16x128xbf16>, vector<128x128xbf16>, vector<16x128xf32> -> vector<16x128xf32>
    %cst_7 = arith.constant dense<0.000000e+00> : vector<16x128xf32>
    %16 = tpu.matmul %14, %1, %cst_7 {dimension_numbers = #tpu.dot_dimension_numbers<[1], [0], [0], [1], [0, 0, 1, 1], [], []>} : vector<16x128xbf16>, vector<128x128xbf16>, vector<16x128xf32> -> vector<16x128xf32>
    %17 = arith.addf %15, %16 : vector<16x128xf32>
    %cst_8 = arith.constant 3.125000e-02 : f32
    %18 = vector.broadcast %cst_8 : f32 to vector<16x128xf32>
    %19 = arith.mulf %9, %18 : vector<16x128xf32>
    %cst_9 = arith.constant 3.125000e-02 : f32
    %20 = vector.broadcast %cst_9 : f32 to vector<16x128xf32>
    %21 = arith.mulf %17, %20 : vector<16x128xf32>
    %22 = arith.mulf %19, %19 : vector<16x128xf32>
    %23 = arith.subf %21, %22 : vector<16x128xf32>
    %cst_10 = arith.constant 9.99999974E-6 : f32
    %24 = vector.broadcast %cst_10 : f32 to vector<16x128xf32>
    %25 = arith.addf %23, %24 : vector<16x128xf32>
    %26 = math.rsqrt %25 : vector<16x128xf32>
    %27 = vector.broadcast %2 : vector<1x128xf32> to vector<16x128xf32>
    %28 = arith.mulf %26, %27 : vector<16x128xf32>
    %29 = arith.mulf %0, %28 : vector<16x128xf32>
    %c0_11 = arith.constant 0 : index
    %c0_12 = arith.constant 0 : index
    %30 = vector.load %arg4[%c0_11, %c0_12] : memref<16x128xf32, #tpu.memory_space<vmem>>, vector<16x128xf32>
    tpu.vector_store %arg4[%c0_11, %c0_12], %29 {strides = array<i32>} : memref<16x128xf32, #tpu.memory_space<vmem>>, vector<16x128xf32>,
    return
  }
  func.func @transform_0(%arg0: i32) -> (i32, i32) {
    %c0_i32 = arith.constant 0 : i32
    %c0_i32_0 = arith.constant 0 : i32
    return %arg0, %c0_i32 : i32, i32
  }
  func.func @transform_1(%arg0: i32) -> (i32, i32) {
    %c0_i32 = arith.constant 0 : i32
    %c0_i32_0 = arith.constant 0 : i32
    %c0_i32_1 = arith.constant 0 : i32
    return %c0_i32, %c0_i32_0 : i32, i32
  }
  func.func @transform_2(%arg0: i32) -> (i32, i32) {
    %c0_i32 = arith.constant 0 : i32
    %c0_i32_0 = arith.constant 0 : i32
    %c0_i32_1 = arith.constant 0 : i32
    return %c0_i32, %c0_i32_0 : i32, i32
  }
  func.func @transform_3(%arg0: i32) -> (i32, i32) {
    %c0_i32 = arith.constant 0 : i32
    %c0_i32_0 = arith.constant 0 : i32
    return %arg0, %c0_i32 : i32, i32
  }
}

</mosaic_0001>

<llo_original>
// kernel: tpu_custom_call.1
$region0: #{tpu_custom_call.1}
  #allocation0 [shape = 'u32[]', space=smem, size = 0x4, offset = 0x4, fixed_abs, tag = 'smem constant byte address 0x4 - core index']
  #allocation1 [shape = 'u32[144,128]{1,0:T(1,128)}', space=vmem, size = 0x12000, scoped, tag = 'internal scratch']
  %s0 = inlined_call_operand.hbm [shape: f32[32,128], index: 0, kind: input, shape index: {}]
  %s1 = inlined_call_operand.vmem [shape: f32[1,128], index: 1, kind: input, shape index: {}]
  %s2 = inlined_call_operand.hbm [shape: bf16[128,128], index: 2, kind: input, shape index: {}]
  %s3 = inlined_call_operand.hbm [shape: f32[32,128], index: 3, kind: output, shape index: {}]
  %s4 = sld [smem:[#allocation0]]
  $region53: #{tpu_custom_call.1} parent=0
    _
  %s6 = ssub.s32 1, %s4
  %s7 = scalar_select 0, %s6, %s4
  $region1: #{tpu_custom_call.1} parent=0
    #allocation2 [shape = 'u8[16384]{0}', space=vmem, size = 0x4000, scoped, tag = 'input window, operand 0']
    #allocation3 [shape = 's32[2]{0}', space=sflag, size = 0x8, scoped, tag = 'scoped memory for tpu_custom_call.1']
    #allocation4 [shape = 's32[2]{0}', space=sflag, size = 0x8, scoped, tag = 'scoped memory for tpu_custom_call.1']
    #allocation5 [shape = 'u8[32768]{0}', space=vmem, size = 0x8000, scoped, tag = 'input window, operand 2, single buffered']
    #allocation6 [shape = 's32[1]{0}', space=sflag, size = 0x4, scoped, tag = 'scoped memory for tpu_custom_call.1']
    #allocation7 [shape = 'u8[16384]{0}', space=vmem, size = 0x4000, scoped, tag = 'output window, operand 0']
    %8 = vsyncpa [#allocation3], 0
    %s9 = scalar_lea.sflag [#allocation3], 1
    %10 = vsyncpa %s9, 0
    %11 = vsyncpa [#allocation6], 0
    %12 = vsyncpa [#allocation4], 0
    %s13 = scalar_lea.sflag [#allocation4], 1
    %14 = vsyncpa %s13, 0
    loop: start=0, step=1, limit=4
    $region2: #{tpu_custom_call.1} parent=1 // loop_pre_header
      _
    $region3: #{tpu_custom_call.1} parent=1 // loop_header
      %s16 = sphi 0, %s20
      %p17 = scmp.ge.s32.totalorder %s16, 4
      %s26 = sphi 0, %s28
      %s29 = sphi 0, %s26
      %s30 = sphi 0, %s29
      %s46 = sphi 0, %s30
      %s50 = sphi 0, %s50
      %s52 = sphi 0, %s50
      %s53 = sphi 0, %s52
      %s67 = sphi 0, %s53
      %s71 = sphi 0, %s71
      %s73 = sphi 0, %s71
      %s74 = sphi 0, %s73
      %s88 = sphi 0, %s74
      %s94 = sphi 0, %s96
      %s97 = sphi 0, %s94
      %s98 = sphi 0, %s97
      %s114 = sphi 0, %s98
    $region4: #{tpu_custom_call.1} parent=1 // loop_header_branch
      %19 = sbr.rel (%p17) target = $region8
    $region5: #{tpu_custom_call.1} parent=1 // loop_body
      %s21 = ssub.s32 %s16, 1
      %s22 = ssub.s32 %s16, 2
      %s23 = sadd.s32 %s16, 1
      %s24 = ssub.s32 %s16, %s23
      %p25 = scmp.eq.s32.totalorder %s24, 0
      %s27 = sadd.s32 %s26, 1
      %s28 = scalar_select %p25, %s26, %s27
      %p31 = pneg %p25
      %p32 = scmp.eq.s32.totalorder %s16, 1
      %p33 = por %p31, %p32
      %p34 = scmp.ne.s32.totalorder %s26, %s29
      %p35 = scmp.eq.s32.totalorder %s16, 0
      %p36 = por %p34, %p35
      %p37 = scmp.ne.s32.totalorder %s26, %s29
      %p38 = scmp.eq.s32.totalorder %s21, 1
      %p39 = por %p37, %p38
      %p40 = scmp.ne.s32.totalorder %s29, %s30
      %p41 = scmp.eq.s32.totalorder %s21, 0
      %p42 = por %p40, %p41
      %p43 = scmp.ne.s32.totalorder %s29, %s30
      %p44 = scmp.eq.s32.totalorder %s22, 1
      %p45 = por %p43, %p44
      %p47 = scmp.ne.s32.totalorder %s30, %s46
      %p48 = scmp.eq.s32.totalorder %s22, 0
      %p49 = por %p47, %p48
      %s51 = sadd.s32 %s50, 1
      %p54 = scmp.eq.s32.totalorder %s16, 1
      %p55 = scmp.ne.s32.totalorder %s50, %s52
      %p56 = scmp.eq.s32.totalorder %s16, 0
      %p57 = por %p55, %p56
      %p58 = scmp.ne.s32.totalorder %s50, %s52
      %p59 = scmp.eq.s32.totalorder %s21, 1
      %p60 = por %p58, %p59
      %p61 = scmp.ne.s32.totalorder %s52, %s53
      %p62 = scmp.eq.s32.totalorder %s21, 0
      %p63 = por %p61, %p62
      %p64 = scmp.ne.s32.totalorder %s52, %s53
      %p65 = scmp.eq.s32.totalorder %s22, 1
      %p66 = por %p64, %p65
      %p68 = scmp.ne.s32.totalorder %s53, %s67
      %p69 = scmp.eq.s32.totalorder %s22, 0
      %p70 = por %p68, %p69
      %s72 = sadd.s32 %s71, 1
      %p75 = scmp.eq.s32.totalorder %s16, 1
      %p76 = scmp.ne.s32.totalorder %s71, %s73
      %p77 = scmp.eq.s32.totalorder %s16, 0
      %p78 = por %p76, %p77
      %p79 = scmp.ne.s32.totalorder %s71, %s73
      %p80 = scmp.eq.s32.totalorder %s21, 1
      %p81 = por %p79, %p80
      %p82 = scmp.ne.s32.totalorder %s73, %s74
      %p83 = scmp.eq.s32.totalorder %s21, 0
      %p84 = por %p82, %p83
      %p85 = scmp.ne.s32.totalorder %s73, %s74
      %p86 = scmp.eq.s32.totalorder %s22, 1
      %p87 = por %p85, %p86
      %p89 = scmp.ne.s32.totalorder %s74, %s88
      %p90 = scmp.eq.s32.totalorder %s22, 0
      %p91 = por %p89, %p90
      %s92 = ssub.s32 %s16, %s23
      %p93 = scmp.eq.s32.totalorder %s92, 0
      %s95 = sadd.s32 %s94, 1
      %s96 = scalar_select %p93, %s94, %s95
      %p99 = pneg %p93
      %p100 = scmp.eq.s32.totalorder %s16, 1
      %p101 = por %p99, %p100
      %p102 = scmp.ne.s32.totalorder %s94, %s97
      %p103 = scmp.eq.s32.totalorder %s16, 0
      %p104 = por %p102, %p103
      %p105 = scmp.ne.s32.totalorder %s94, %s97
      %p106 = scmp.eq.s32.totalorder %s21, 1
      %p107 = por %p105, %p106
      %p108 = scmp.ne.s32.totalorder %s97, %s98
      %p109 = scmp.eq.s32.totalorder %s21, 0
      %p110 = por %p108, %p109
      %p111 = scmp.ne.s32.totalorder %s97, %s98
      %p112 = scmp.eq.s32.totalorder %s22, 1
      %p113 = por %p111, %p112
      %p115 = scmp.ne.s32.totalorder %s98, %s114
      %p116 = scmp.eq.s32.totalorder %s22, 0
      %p117 = por %p115, %p116
      %p118 = scmp.le.s32.totalorder 1, %s16
      %p119 = scmp.lt.s32.totalorder %s16, 3
      %p120 = pnand %p118, %p119
      %p121 = pneg %p120
      // Predicated region
      $region9: #{tpu_custom_call.1} parent=5 // pred_check
        _
      $region10: #{tpu_custom_call.1} parent=5 // pred_check_branch
        %123 = sbr.rel (%p120) target = $region12
      $region11: #{tpu_custom_call.1} parent=5 // pred_region
        %s124 = ssub.s32 %s16, 1
        // Predicated region
        $region13: #{tpu_custom_call.1} parent=11 // pred_check
          %p125 = pneg %p63
        $region14: #{tpu_custom_call.1} parent=11 // pred_check_branch
          %127 = sbr.rel (%p125) target = $region16
        $region15: #{tpu_custom_call.1} parent=11 // pred_region
          _
        $region16: #{tpu_custom_call.1} parent=11 // pred_fallthru
          _
        // Predicated region
        $region17: #{tpu_custom_call.1} parent=11 // pred_check
          %p128 = pneg %p84
        $region18: #{tpu_custom_call.1} parent=11 // pred_check_branch
          %130 = sbr.rel (%p128) target = $region20
        $region19: #{tpu_custom_call.1} parent=11 // pred_region
          %s132 = ssub.s32 1024, 1024
          %133 = vsyncadd [#allocation6], %s132
          %s134 = sshll.u32 [#allocation5], 4
          %s135 = int_to_ptr.vmem [resolvable:$true] %s134
          %140 = dma.hbm_to_vmem [thread:$0]  %s2, 1024, %s135, [#allocation6], 64, 64, 4
        $region20: #{tpu_custom_call.1} parent=11 // pred_fallthru
          _
      $region12: #{tpu_custom_call.1} parent=5 // pred_fallthru
        _
      %p141 = scmp.lt.s32.totalorder %s16, 2
      // Predicated region
      $region21: #{tpu_custom_call.1} parent=5 // pred_check
        %p142 = pneg %p141
      $region22: #{tpu_custom_call.1} parent=5 // pred_check_branch
        %144 = sbr.rel (%p142) target = $region24
      $region23: #{tpu_custom_call.1} parent=5 // pred_region
        // Predicated region
        $region25: #{tpu_custom_call.1} parent=23 // pred_check
          %p145 = pneg %p36
        $region26: #{tpu_custom_call.1} parent=23 // pred_check_branch
          %147 = sbr.rel (%p145) target = $region28
        $region27: #{tpu_custom_call.1} parent=23 // pred_region
          %s148 = sand.u32 %s26, 1
          %s149 = scalar_lea.sflag [#allocation3], %s148
          %s150 = sand.u32 %s26, 1
          %s151 = smul.addr %s150, 16
          %s152 = scalar_lea.vmem [#allocation2], %s151
          %s153 = smul.u32 2, %s16
          %s155 = ssub.s32 256, 256
          %156 = vsyncadd %s149, %s155
          %s157 = smul.addr %s153, 128
          %s158 = scalar_lea.hbm %s0, %s157
          %s159 = sshll.u32 %s152, 4
          %s160 = int_to_ptr.vmem [resolvable:$true] %s159
          %165 = dma.hbm_to_vmem [thread:$0]  %s158, 256, %s160, %s149, 128, 128, 8
        $region28: #{tpu_custom_call.1} parent=23 // pred_fallthru
          _
      $region24: #{tpu_custom_call.1} parent=5 // pred_fallthru
        _
      %p166 = scmp.le.s32.totalorder 1, %s16
      %p167 = scmp.lt.s32.totalorder %s16, 3
      %p168 = pnand %p166, %p167
      %p169 = pneg %p168
      // Predicated region
      $region29: #{tpu_custom_call.1} parent=5 // pred_check
        _
      $region30: #{tpu_custom_call.1} parent=5 // pred_check_branch
        %171 = sbr.rel (%p168) target = $region32
      $region31: #{tpu_custom_call.1} parent=5 // pred_region
        %s172 = ssub.s32 %s16, 1
        %s173 = sand.u32 %s29, 1
        %s174 = scalar_lea.sflag [#allocation3], %s173
        %s175 = sand.u32 %s29, 1
        %s176 = smul.addr %s175, 16
        %s177 = scalar_lea.vmem [#allocation2], %s176
        // Predicated region
        $region33: #{tpu_custom_call.1} parent=31 // pred_check
          %p178 = pneg %p42
        $region34: #{tpu_custom_call.1} parent=31 // pred_check_branch
          %180 = sbr.rel (%p178) target = $region36
        $region35: #{tpu_custom_call.1} parent=31 // pred_region
          %181 = dma.done %s174, 256
        $region36: #{tpu_custom_call.1} parent=31 // pred_fallthru
          _
        // Predicated region
        $region37: #{tpu_custom_call.1} parent=31 // pred_check
          %p182 = pneg %p84
        $region38: #{tpu_custom_call.1} parent=31 // pred_check_branch
          %184 = sbr.rel (%p182) target = $region40
        $region39: #{tpu_custom_call.1} parent=31 // pred_region
          %185 = dma.done [#allocation6], 1024
        $region40: #{tpu_custom_call.1} parent=31 // pred_fallthru
          _
        %s186 = sand.u32 %s29, 1
        %s187 = scalar_lea.sflag [#allocation3], %s186
        %s188 = sand.u32 %s29, 1
        %s189 = smul.addr %s188, 16
        %s190 = scalar_lea.vmem [#allocation2], %s189
        %p191 = pneg %p42
        %p192 = pneg %p39
        %p193 = pneg %p63
        %p194 = pneg %p60
        %p195 = pneg %p84
        %p196 = pneg %p81
        %p197 = pneg %p110
        %p198 = pneg %p107
        %s199 = sand.u32 %s97, 1
        %s200 = scalar_lea.sflag [#allocation4], %s199
        %s201 = sand.u32 %s97, 1
        %s202 = smul.addr %s201, 16
        %s203 = scalar_lea.vmem [#allocation7], %s202
        %s204 = smul.u32 2, %s21
        %s205 = smul.u32 2, %s21
        %v207 = vld [vmem:[%s177] sm:$0xff]
        %v208 = vld [vmem:[%s177 + $0x8] sm:$0xff]
        %v209 = vld [vmem:[#allocation5] sm:$0xf]
        %v210 = vld [vmem:[#allocation5 + $0x4] sm:$0xf]
        %v211 = vld [vmem:[#allocation5 + $0x8] sm:$0xf]
        %v212 = vld [vmem:[#allocation5 + $0xc] sm:$0xf]
        %v213 = vld [vmem:[#allocation5 + $0x10] sm:$0xf]
        %v214 = vld [vmem:[#allocation5 + $0x14] sm:$0xf]
        %v215 = vld [vmem:[#allocation5 + $0x18] sm:$0xf]
        %v216 = vld [vmem:[#allocation5 + $0x1c] sm:$0xf]
        %v217 = vld [vmem:[#allocation5 + $0x20] sm:$0xf]
        %v218 = vld [vmem:[#allocation5 + $0x24] sm:$0xf]
        %v219 = vld [vmem:[#allocation5 + $0x28] sm:$0xf]
        %v220 = vld [vmem:[#allocation5 + $0x2c] sm:$0xf]
        %v221 = vld [vmem:[#allocation5 + $0x30] sm:$0xf]
        %v222 = vld [vmem:[#allocation5 + $0x34] sm:$0xf]
        %v223 = vld [vmem:[#allocation5 + $0x38] sm:$0xf]
        %v224 = vld [vmem:[#allocation5 + $0x3c] sm:$0xf]
        %v225 = vld [vmem:[%s1] sm:$0x1]
        %v226 = vpack.c.bf16 %v208, %v207
        %v227 = vunpack.c.l.bf16 %v226
        %v228 = vunpack.c.h.bf16 %v226
        %v229 = vsub.f32 %v207, %v227
        %v230 = vsub.f32 %v208, %v228
        %v231 = vpack.c.bf16 %v230, %v229
        %v248 = vunpack.c.l.b16 %v209
        %v249 = vunpack.c.l.b16 %v210
        %v250 = vunpack.c.l.b16 %v211
        %v251 = vunpack.c.l.b16 %v212
        %v252 = vunpack.c.l.b16 %v213
        %v253 = vunpack.c.l.b16 %v214
        %v254 = vunpack.c.l.b16 %v215
        %v255 = vunpack.c.l.b16 %v216
        %v256 = vunpack.c.l.b16 %v217
        %v257 = vunpack.c.l.b16 %v218
        %v258 = vunpack.c.l.b16 %v219
        %v259 = vunpack.c.l.b16 %v220
        %v260 = vunpack.c.l.b16 %v221
        %v261 = vunpack.c.l.b16 %v222
        %v262 = vunpack.c.l.b16 %v223
        %v263 = vunpack.c.l.b16 %v224
        %v264 = vpack.c.b16 %v249, %v248
        %v265 = vpack.c.b16 %v251, %v250
        %v266 = vpack.c.b16 %v253, %v252
        %v267 = vpack.c.b16 %v255, %v254
        %v268 = vpack.c.b16 %v257, %v256
        %v269 = vpack.c.b16 %v259, %v258
        %v270 = vpack.c.b16 %v261, %v260
        %v271 = vpack.c.b16 %v263, %v262
        %280 = vmatprep.subr.bf16.mxu0 0
        %281 = vmatpush1.bf16.msra.mxu0 %v271
        %282 = vmatprep.subr.bf16.mxu0 0
        %283 = vmatpush1.bf16.msra.mxu0 %v270
        %284 = vmatprep.subr.bf16.mxu0 0
        %285 = vmatpush1.bf16.msra.mxu0 %v269
        %286 = vmatprep.subr.bf16.mxu0 0
        %287 = vmatpush1.bf16.msra.mxu0 %v268
        %288 = vmatprep.subr.bf16.mxu0 0
        %289 = vmatpush1.bf16.msra.mxu0 %v267
        %290 = vmatprep.subr.bf16.mxu0 0
        %291 = vmatpush1.bf16.msra.mxu0 %v266
        %292 = vmatprep.subr.bf16.mxu0 0
        %293 = vmatpush1.bf16.msra.mxu0 %v265
        %294 = vmatprep.subr.bf16.mxu0 0
        %295 = vmatpush1.bf16.msra.mxu0 %v264
        %296 = vmatprep.subr.bf16.mxu0 0
        %297 = vmatpush2.bf16.msra.mxu0 0
        %298 = vmatprep.subr.bf16.mxu0 0
        %299 = vmatpush2.bf16.msra.mxu0 0
        %300 = vmatprep.subr.bf16.mxu0 0
        %301 = vmatpush2.bf16.msra.mxu0 0
        %302 = vmatprep.subr.bf16.mxu0 0
        %303 = vmatpush2.bf16.msra.mxu0 0
        %304 = vmatprep.subr.bf16.mxu0 0
        %305 = vmatpush2.bf16.msra.mxu0 0
        %306 = vmatprep.subr.bf16.mxu0 0
        %307 = vmatpush2.bf16.msra.mxu0 0
        %308 = vmatprep.subr.bf16.mxu0 0
        %309 = vmatpush2.bf16.msra.mxu0 0
        %310 = vmatprep.subr.bf16.mxu0 0
        %311 = vmatpush2.bf16.msra.mxu0 0
        %312 = vmatprep.mubr.bf16.mxu0 0
        %313 = vmatmul.mubr.bf16.gmra.mxu0 %v231
        %v314 = vpop.f32.mrf.mxu0
        %v315 = vadd.f32 0.0, %v314
        %v316 = vpop.f32.mrf.mxu0
        %v317 = vpop.f32.mrf.mxu0
        %v318 = vadd.f32 0.0, %v317
        %v319 = vpop.f32.mrf.mxu0
        %320 = vdwg.mxu0
        %321 = vmatprep.subr.bf16.mxu0 0
        %322 = vmatpush1.bf16.msra.mxu0 %v271
        %323 = vmatprep.subr.bf16.mxu0 0
        %324 = vmatpush1.bf16.msra.mxu0 %v270
        %325 = vmatprep.subr.bf16.mxu0 0
        %326 = vmatpush1.bf16.msra.mxu0 %v269
        %327 = vmatprep.subr.bf16.mxu0 0
        %328 = vmatpush1.bf16.msra.mxu0 %v268
        %329 = vmatprep.subr.bf16.mxu0 0
        %330 = vmatpush1.bf16.msra.mxu0 %v267
        %331 = vmatprep.subr.bf16.mxu0 0
        %332 = vmatpush1.bf16.msra.mxu0 %v266
        %333 = vmatprep.subr.bf16.mxu0 0
        %334 = vmatpush1.bf16.msra.mxu0 %v265
        %335 = vmatprep.subr.bf16.mxu0 0
        %336 = vmatpush1.bf16.msra.mxu0 %v264
        %337 = vmatprep.subr.bf16.mxu0 0
        %338 = vmatpush2.bf16.msra.mxu0 0
        %339 = vmatprep.subr.bf16.mxu0 0
        %340 = vmatpush2.bf16.msra.mxu0 0
        %341 = vmatprep.subr.bf16.mxu0 0
        %342 = vmatpush2.bf16.msra.mxu0 0
        %343 = vmatprep.subr.bf16.mxu0 0
        %344 = vmatpush2.bf16.msra.mxu0 0
        %345 = vmatprep.subr.bf16.mxu0 0
        %346 = vmatpush2.bf16.msra.mxu0 0
        %347 = vmatprep.subr.bf16.mxu0 0
        %348 = vmatpush2.bf16.msra.mxu0 0
        %349 = vmatprep.subr.bf16.mxu0 0
        %350 = vmatpush2.bf16.msra.mxu0 0
        %351 = vmatprep.subr.bf16.mxu0 0
        %352 = vmatpush2.bf16.msra.mxu0 0
        %353 = vmatprep.mubr.bf16.mxu0 0
        %354 = vmatmul.mubr.bf16.gmra.mxu0 %v226
        %v355 = vpop.f32.mrf.mxu0
        %v356 = vadd.f32 %v315, %v355
        %v357 = vpop.f32.mrf.mxu0
        %v358 = vpop.f32.mrf.mxu0
        %v359 = vadd.f32 %v318, %v358
        %v360 = vpop.f32.mrf.mxu0
        %361 = vdwg.mxu0
        %v362 = vmul.f32 %v207, %v207
        %v363 = vmul.f32 %v208, %v208
        %v364 = vpack.c.bf16 %v363, %v362
        %v365 = vunpack.c.l.bf16 %v364
        %v366 = vunpack.c.h.bf16 %v364
        %v367 = vsub.f32 %v362, %v365
        %v368 = vsub.f32 %v363, %v366
        %v369 = vpack.c.bf16 %v368, %v367
        %370 = vmatprep.subr.bf16.mxu0 0
        %371 = vmatpush1.bf16.msra.mxu0 %v271
        %372 = vmatprep.subr.bf16.mxu0 0
        %373 = vmatpush1.bf16.msra.mxu0 %v270
        %374 = vmatprep.subr.bf16.mxu0 0
        %375 = vmatpush1.bf16.msra.mxu0 %v269
        %376 = vmatprep.subr.bf16.mxu0 0
        %377 = vmatpush1.bf16.msra.mxu0 %v268
        %378 = vmatprep.subr.bf16.mxu0 0
        %379 = vmatpush1.bf16.msra.mxu0 %v267
        %380 = vmatprep.subr.bf16.mxu0 0
        %381 = vmatpush1.bf16.msra.mxu0 %v266
        %382 = vmatprep.subr.bf16.mxu0 0
        %383 = vmatpush1.bf16.msra.mxu0 %v265
        %384 = vmatprep.subr.bf16.mxu0 0
        %385 = vmatpush1.bf16.msra.mxu0 %v264
        %386 = vmatprep.subr.bf16.mxu0 0
        %387 = vmatpush2.bf16.msra.mxu0 0
        %388 = vmatprep.subr.bf16.mxu0 0
        %389 = vmatpush2.bf16.msra.mxu0 0
        %390 = vmatprep.subr.bf16.mxu0 0
        %391 = vmatpush2.bf16.msra.mxu0 0
        %392 = vmatprep.subr.bf16.mxu0 0
        %393 = vmatpush2.bf16.msra.mxu0 0
        %394 = vmatprep.subr.bf16.mxu0 0
        %395 = vmatpush2.bf16.msra.mxu0 0
        %396 = vmatprep.subr.bf16.mxu0 0
        %397 = vmatpush2.bf16.msra.mxu0 0
        %398 = vmatprep.subr.bf16.mxu0 0
        %399 = vmatpush2.bf16.msra.mxu0 0
        %400 = vmatprep.subr.bf16.mxu0 0
        %401 = vmatpush2.bf16.msra.mxu0 0
        %402 = vmatprep.mubr.bf16.mxu0 0
        %403 = vmatmul.mubr.bf16.gmra.mxu0 %v369
        %v404 = vpop.f32.mrf.mxu0
        %v405 = vadd.f32 0.0, %v404
        %v406 = vpop.f32.mrf.mxu0
        %v407 = vpop.f32.mrf.mxu0
        %v408 = vadd.f32 0.0, %v407
        %v409 = vpop.f32.mrf.mxu0
        %410 = vdwg.mxu0
        %411 = vmatprep.subr.bf16.mxu0 0
        %412 = vmatpush1.bf16.msra.mxu0 %v271
        %413 = vmatprep.subr.bf16.mxu0 0
        %414 = vmatpush1.bf16.msra.mxu0 %v270
        %415 = vmatprep.subr.bf16.mxu0 0
        %416 = vmatpush1.bf16.msra.mxu0 %v269
        %417 = vmatprep.subr.bf16.mxu0 0
        %418 = vmatpush1.bf16.msra.mxu0 %v268
        %419 = vmatprep.subr.bf16.mxu0 0
        %420 = vmatpush1.bf16.msra.mxu0 %v267
        %421 = vmatprep.subr.bf16.mxu0 0
        %422 = vmatpush1.bf16.msra.mxu0 %v266
        %423 = vmatprep.subr.bf16.mxu0 0
        %424 = vmatpush1.bf16.msra.mxu0 %v265
        %425 = vmatprep.subr.bf16.mxu0 0
        %426 = vmatpush1.bf16.msra.mxu0 %v264
        %427 = vmatprep.subr.bf16.mxu0 0
        %428 = vmatpush2.bf16.msra.mxu0 0
        %429 = vmatprep.subr.bf16.mxu0 0
        %430 = vmatpush2.bf16.msra.mxu0 0
        %431 = vmatprep.subr.bf16.mxu0 0
        %432 = vmatpush2.bf16.msra.mxu0 0
        %433 = vmatprep.subr.bf16.mxu0 0
        %434 = vmatpush2.bf16.msra.mxu0 0
        %435 = vmatprep.subr.bf16.mxu0 0
        %436 = vmatpush2.bf16.msra.mxu0 0
        %437 = vmatprep.subr.bf16.mxu0 0
        %438 = vmatpush2.bf16.msra.mxu0 0
        %439 = vmatprep.subr.bf16.mxu0 0
        %440 = vmatpush2.bf16.msra.mxu0 0
        %441 = vmatprep.subr.bf16.mxu0 0
        %442 = vmatpush2.bf16.msra.mxu0 0
        %443 = vmatprep.mubr.bf16.mxu0 0
        %444 = vmatmul.mubr.bf16.gmra.mxu0 %v364
        %v445 = vpop.f32.mrf.mxu0
        %v446 = vadd.f32 %v405, %v445
        %v447 = vpop.f32.mrf.mxu0
        %v448 = vpop.f32.mrf.mxu0
        %v449 = vadd.f32 %v408, %v448
        %v450 = vpop.f32.mrf.mxu0
        %451 = vdwg.mxu0
        %v452 = vmul.f32 %v356, 0.03125
        %v453 = vmul.f32 %v359, 0.03125
        %v454 = vmul.f32 %v446, 0.03125
        %v455 = vmul.f32 %v449, 0.03125
        %v456 = vmul.f32 %v452, %v452
        %v457 = vmul.f32 %v453, %v453
        %v458 = vsub.f32 %v454, %v456
        %v459 = vsub.f32 %v455, %v457
        %v460 = vadd.f32 %v458, 1e-05
        %v461 = vadd.f32 %v459, 1e-05
        %v462 = vrsqrt.pop %v460
        %v463 = vrsqrt.pop %v461
        %v465 = vlaneseq
        %v466 = vshrl.u32 %v465, 7
        %v467 = vsub.s32 0, %v466
        %v468 = vrot.slane %v225, %v467
        %v470 = vmul.f32 %v462, %v468
        %v471 = vmul.f32 %v463, %v468
        %v472 = vmul.f32 %v207, %v470
        %v473 = vmul.f32 %v208, %v471
        %474 = vst [vmem:[%s203] sm:$0xff] %v472
        %475 = vst [vmem:[%s203 + $0x8] sm:$0xff] %v473
        %s476 = sand.u32 %s97, 1
        %s477 = scalar_lea.sflag [#allocation4], %s476
        %s478 = sand.u32 %s97, 1
        %s479 = smul.addr %s478, 16
        %s480 = scalar_lea.vmem [#allocation7], %s479
        // Predicated region
        $region41: #{tpu_custom_call.1} parent=31 // pred_check
          %p481 = pneg %p107
        $region42: #{tpu_custom_call.1} parent=31 // pred_check_branch
          %483 = sbr.rel (%p481) target = $region44
        $region43: #{tpu_custom_call.1} parent=31 // pred_region
          %s484 = smul.u32 2, %s21
          %s486 = ssub.s32 256, 256
          %487 = vsyncadd %s477, %s486
          %s488 = smul.addr %s484, 128
          %s489 = scalar_lea.hbm %s3, %s488
          %s490 = sshll.u32 %s480, 4
          %s491 = int_to_ptr.vmem [resolvable:$true] %s490
          %496 = dma.vmem_to_hbm [thread:$0]  %s491, 256, %s489, %s477, 128, 128, 8
        $region44: #{tpu_custom_call.1} parent=31 // pred_fallthru
          _
      $region32: #{tpu_custom_call.1} parent=5 // pred_fallthru
        _
      %p497 = scmp.le.s32.totalorder 2, %s16
      // Predicated region
      $region45: #{tpu_custom_call.1} parent=5 // pred_check
        %p498 = pneg %p497
      $region46: #{tpu_custom_call.1} parent=5 // pred_check_branch
        %500 = sbr.rel (%p498) target = $region48
      $region47: #{tpu_custom_call.1} parent=5 // pred_region
        %s501 = ssub.s32 %s16, 2
        // Predicated region
        $region49: #{tpu_custom_call.1} parent=47 // pred_check
          %p502 = pneg %p113
        $region50: #{tpu_custom_call.1} parent=47 // pred_check_branch
          %504 = sbr.rel (%p502) target = $region52
        $region51: #{tpu_custom_call.1} parent=47 // pred_region
          %s505 = sand.u32 %s98, 1
          %s506 = scalar_lea.sflag [#allocation4], %s505
          %s507 = sand.u32 %s98, 1
          %s508 = smul.addr %s507, 16
          %s509 = scalar_lea.vmem [#allocation7], %s508
          %510 = dma.done %s506, 256
        $region52: #{tpu_custom_call.1} parent=47 // pred_fallthru
          _
      $region48: #{tpu_custom_call.1} parent=5 // pred_fallthru
        _
    $region6: #{tpu_custom_call.1} parent=1 // loop_footer
      %s20 = sadd.s32 1, %s16
    $region7: #{tpu_custom_call.1} parent=1 // loop_footer_branch
      %15 = sbr.rel target = $region3
    $region8: #{tpu_custom_call.1} parent=1 // loop_exit
      _
    %511 = vsyncpa [#allocation3], 1
    %s512 = scalar_lea.sflag [#allocation3], 1
    %513 = vsyncpa %s512, 1
    %514 = vsyncpa [#allocation6], 1
    %515 = vsyncpa [#allocation4], 1
    %s516 = scalar_lea.sflag [#allocation4], 1
    %517 = vsyncpa %s516, 1

</llo_original>
